<compile_context>
chip_gen: v6e
topology: v6e:2x2x1
jax: 0.10.0
libtpu: 0.0.40
codegen_flags: <defaults>
</compile_context>

<pallas_src>
import math

import jax
import jax.numpy as jnp
from jax.experimental import pallas as pl
from jax.experimental.pallas import tpu as pltpu


def _round_up(x, m):
    return -(-x // m) * m


def _folded_linear_kernel(xt_ref, w_ref, b_ref, o_ref):
    # xt_ref: (A, tm) f32 — batch on the lane axis (lane-dense tile of x^T)
    # w_ref : (A, 1)  f32 — folded weight W1 @ W2, broadcast across lanes (VPU)
    # b_ref : (1,)    f32 — folded scalar bias b1 @ W2 + b2, in SMEM
    # o_ref : (1, tm) f32 — lane-dense output row
    prod = xt_ref[...] * w_ref[...]                              # VPU multiply
    o_ref[...] = jnp.sum(prod, axis=0, keepdims=True) + b_ref[0]  # XLU sublane reduce


def linear_regressor_forward(x, w1, b1, w2, b2, *, tm_max=8192):
    """x: (B, A) f32; w1: (A, H); b1: (1, H); w2: (H, 1); b2: (1, 1) -> squeeze((B, 1))."""
    x = x.astype(jnp.float32)
    B, A = x.shape

    # ---- Algebraic fold (exact up to f32 reassociation): rank-1 second layer ----
    w_eff = (w1.astype(jnp.float32) @ w2.astype(jnp.float32)).reshape(A, 1)   # (A, 1)
    b_eff = (b1.astype(jnp.float32) @ w2.astype(jnp.float32)
             + b2.astype(jnp.float32)).reshape(1)                             # (1,)

    # ---- Tile selection: batch on lanes, tm multiple of 128 ----
    tm_max = max(128, (tm_max // 128) * 128)
    B_pad_min = _round_up(B, 128)
    tm = min(tm_max, B_pad_min)
    # If all work fits in a single tile but there is enough of it, split into two
    # tiles so the "parallel" grid axis can feed both v7x TensorCores.
    if tm == B_pad_min and B_pad_min >= 256 and (B_pad_min // 2) % 128 == 0:
        tm = B_pad_min // 2
    num_tiles = -(-B // tm)
    B_pad = num_tiles * tm

    # Present x with batch as the minor (lane) dim; zero-pad the extra lanes.
    x_t = jnp.pad(x.T, ((0, 0), (0, B_pad - B)))                 # (A, B_pad)

    flops = 2 * A * B_pad + B_pad
    bytes_accessed = 4 * (A * B_pad + A + 1 + B_pad)
    cost = pl.CostEstimate(flops=flops, transcendentals=0,
                           bytes_accessed=bytes_accessed)

    # Per-step VMEM: double-buffered x tile + output row + resident folded weight.
    vmem_bytes = (2 * A * tm * 4) + (2 * 8 * tm * 4) + (2 * max(A, 8) * 128 * 4)
    vmem_limit = int(min(max(vmem_bytes + (1 << 20), 8 << 20), 32 << 20))

    out = pl.pallas_call(
        _folded_linear_kernel,
        out_shape=jax.ShapeDtypeStruct((1, B_pad), jnp.float32),
        grid=(num_tiles,),
        in_specs=[
            pl.BlockSpec((A, tm), lambda i: (0, i)),             # x^T tile (streamed)
            pl.BlockSpec((A, 1), lambda i: (0, 0)),              # folded weight (resident)
            pl.BlockSpec(memory_space=pltpu.MemorySpace.SMEM),   # folded scalar bias
        ],
        out_specs=pl.BlockSpec((1, tm), lambda i: (0, i)),       # lane-dense output slab
        compiler_params=pltpu.CompilerParams(
            dimension_semantics=("parallel",),
            vmem_limit_bytes=vmem_limit),
        cost_estimate=cost,
    )(x_t, w_eff, b_eff)

    # Drop padding; PyTorch .squeeze() on (B, 1): (B,) for B>1, scalar for B==1.
    y = out.reshape(-1)[:B]
    return jnp.squeeze(y)


def init_params(key, attributes, hidden=1024):
    """Deterministic init mirroring the PyTorch module:
       - weights: xavier_uniform_
       - biases: nn.Linear default, U(-1/sqrt(fan_in), 1/sqrt(fan_in))
    """
    k1, k2, k3, k4 = jax.random.split(key, 4)

    # layer1: Linear(attributes, 1024) — weight (1024, A); stored transposed (A, 1024)
    bound1 = math.sqrt(6.0 / (attributes + hidden))
    w1 = jax.random.uniform(k1, (attributes, hidden), jnp.float32,
                            minval=-bound1, maxval=bound1)
    bb1 = 1.0 / math.sqrt(attributes)
    b1 = jax.random.uniform(k2, (1, hidden), jnp.float32, minval=-bb1, maxval=bb1)

    # layer2: Linear(1024, 1) — weight (1, 1024); stored transposed (1024, 1)
    bound2 = math.sqrt(6.0 / (hidden + 1))
    w2 = jax.random.uniform(k3, (hidden, 1), jnp.float32,
                            minval=-bound2, maxval=bound2)
    bb2 = 1.0 / math.sqrt(hidden)
    b2 = jax.random.uniform(k4, (1, 1), jnp.float32, minval=-bb2, maxval=bb2)

    return w1, b1, w2, b2


if __name__ == "__main__":
    key = jax.random.PRNGKey(0)
    k_param, k_x = jax.random.split(key)

    batch = 8
    attributes = 32   # 'attibutes' argument of the PyTorch module

    w1, b1, w2, b2 = init_params(k_param, attributes)
    x = jax.random.normal(k_x, (batch, attributes), jnp.float32)

    y = linear_regressor_forward(x, w1, b1, w2, b2)
    jax.block_until_ready(y)

    # Sanity check vs. pure-JAX reference of the original two-layer forward.
    # (The rank-1 fold reassociates the f32 reduction; differences are ~1e-6.)
    y_ref = jnp.squeeze((x @ w1 + b1) @ w2 + b2)
    assert y.shape == (batch,)
    assert jnp.allclose(y, y_ref, atol=5e-4, rtol=5e-4)

    print("KERNEL_OK")
</pallas_src>

<mosaic_0001>
module attributes {stable_mosaic.version = 11 : i64} {
  func.func @_folded_linear_kernel(%arg0: i32, %arg1: memref<32x128xf32, #tpu.memory_space<vmem>>, %arg2: memref<32x1xf32, #tpu.memory_space<vmem>>, %arg3: memref<1xf32, #tpu.memory_space<smem>>, %arg4: memref<1x128xf32, #tpu.memory_space<vmem>>) attributes {dimension_semantics = [#tpu.dimension_semantics<parallel>], iteration_bounds = array<i64: 1>, scalar_prefetch = 0 : i64, scratch_operands = 0 : i64, tpu.core_type = #tpu.core_type<tc>, window_params = [{transform_indices = @transform_0, window_bounds = array<i64: 32, 128>}, {pipeline_mode = #tpu.pipeline_mode<synchronous>, transform_indices = @transform_1, window_bounds = array<i64: 32, 1>}, {transform_indices = @transform_2, window_bounds = array<i64: 1>}, {transform_indices = @transform_3, window_bounds = array<i64: 1, 128>}]} {
    %c0 = arith.constant 0 : index
    %c0_0 = arith.constant 0 : index
    %0 = vector.load %arg1[%c0, %c0_0] : memref<32x128xf32, #tpu.memory_space<vmem>>, vector<32x128xf32>
    %c0_1 = arith.constant 0 : index
    %c0_2 = arith.constant 0 : index
    %1 = vector.load %arg2[%c0_1, %c0_2] : memref<32x1xf32, #tpu.memory_space<vmem>>, vector<32x1xf32>
    %2 = vector.broadcast %1 : vector<32x1xf32> to vector<32x128xf32>
    %3 = arith.mulf %0, %2 : vector<32x128xf32>
    %cst = arith.constant dense<0.000000e+00> : vector<128xf32>
    %4 = vector.multi_reduction <add>, %3, %cst [0] : vector<32x128xf32> to vector<128xf32>
    %5 = vector.shape_cast %4 : vector<128xf32> to vector<1x128xf32>
    %c0_3 = arith.constant 0 : index
    %6 = memref.load %arg3[%c0_3] : memref<1xf32, #tpu.memory_space<smem>>
    %7 = vector.broadcast %6 : f32 to vector<1x128xf32>
    %8 = arith.addf %5, %7 : vector<1x128xf32>
    %c0_4 = arith.constant 0 : index
    %c0_5 = arith.constant 0 : index
    %9 = vector.load %arg4[%c0_4, %c0_5] : memref<1x128xf32, #tpu.memory_space<vmem>>, vector<1x128xf32>
    tpu.vector_store %arg4[%c0_4, %c0_5], %8 {strides = array<i32>} : memref<1x128xf32, #tpu.memory_space<vmem>>, vector<1x128xf32>,
    return
  }
  func.func @transform_0(%arg0: i32) -> (i32, i32) {
    %c0_i32 = arith.constant 0 : i32
    %c0_i32_0 = arith.constant 0 : i32
    return %c0_i32, %arg0 : i32, i32
  }
  func.func @transform_1(%arg0: i32) -> (i32, i32) {
    %c0_i32 = arith.constant 0 : i32
    %c0_i32_0 = arith.constant 0 : i32
    %c0_i32_1 = arith.constant 0 : i32
    return %c0_i32, %c0_i32_0 : i32, i32
  }
  func.func @transform_2(%arg0: i32) -> i32 {
    %c0_i32 = arith.constant 0 : i32
    %c0_i32_0 = arith.constant 0 : i32
    return %c0_i32 : i32
  }
  func.func @transform_3(%arg0: i32) -> (i32, i32) {
    %c0_i32 = arith.constant 0 : i32
    %c0_i32_0 = arith.constant 0 : i32
    return %c0_i32, %arg0 : i32, i32
  }
}

</mosaic_0001>

<llo_original>
// kernel: tpu_custom_call.1
$region0: #{tpu_custom_call.1}
  #allocation0 [shape = 'u32[]', space=smem, size = 0x4, offset = 0x4, fixed_abs, tag = 'smem constant byte address 0x4 - core index']
  #allocation1 [shape = 'u32[144,128]{1,0:T(1,128)}', space=vmem, size = 0x12000, scoped, tag = 'internal scratch']
  #allocation2 [shape = 'f32[1]{0:T(128)S(6)}', space=smem, size = 0x200, scoped, tag = 'scoped memory for tpu_custom_call.1']
  %s0 = inlined_call_operand.vmem [shape: f32[32,128], index: 0, kind: input, shape index: {}]
  %s1 = inlined_call_operand.vmem [shape: f32[32,1], index: 1, kind: input, shape index: {}]
  %s2 = inlined_call_operand.<no memory space> [shape: f32[1], index: 2, kind: input, shape index: {}]
  %s3 = inlined_call_operand.hbm [shape: f32[1,128], index: 3, kind: output, shape index: {}]
  %s4 = sld [smem:[#allocation0]]
  $region22: #{tpu_custom_call.1} parent=0
    _
  %s6 = ssub.s32 1, %s4
  %s7 = scalar_select 0, %s6, %s4
  %8 = sst [smem:[#allocation2]] %s2
  $region1: #{tpu_custom_call.1} parent=0
    #allocation3 [shape = 'u8[512]{0}', space=vmem, size = 0x400, scoped, tag = 'output window, operand 0, single buffered']
    #allocation4 [shape = 's32[1]{0}', space=sflag, size = 0x4, scoped, tag = 'scoped memory for tpu_custom_call.1']
    %9 = vsyncpa [#allocation4], 0
    // Predicated region
    $region2: #{tpu_custom_call.1} parent=1 // pred_check
      _
    $region3: #{tpu_custom_call.1} parent=1 // pred_check_branch
      %11 = sbr.rel (0) target = $region5
    $region4: #{tpu_custom_call.1} parent=1 // pred_region
      _
    $region5: #{tpu_custom_call.1} parent=1 // pred_fallthru
      _
    // Predicated region
    $region6: #{tpu_custom_call.1} parent=1 // pred_check
      _
    $region7: #{tpu_custom_call.1} parent=1 // pred_check_branch
      %13 = sbr.rel (0) target = $region9
    $region8: #{tpu_custom_call.1} parent=1 // pred_region
      _
    $region9: #{tpu_custom_call.1} parent=1 // pred_fallthru
      _
    // Predicated region
    $region10: #{tpu_custom_call.1} parent=1 // pred_check
      _
    $region11: #{tpu_custom_call.1} parent=1 // pred_check_branch
      %15 = sbr.rel (0) target = $region13
    $region12: #{tpu_custom_call.1} parent=1 // pred_region
      _
    $region13: #{tpu_custom_call.1} parent=1 // pred_fallthru
      _
    %v16 = vld [vmem:[%s0] sm:$0xff]
    %v17 = vld [vmem:[%s0 + $0x8] sm:$0xff]
    %v18 = vld [vmem:[%s0 + $0x10] sm:$0xff]
    %v19 = vld [vmem:[%s0 + $0x18] sm:$0xff]
    %v20 = vld [vmem:[%s1] sm:$0xff]
    %v21 = vld [vmem:[%s1 + $0x8] sm:$0xff]
    %v22 = vld [vmem:[%s1 + $0x10] sm:$0xff]
    %v23 = vld [vmem:[%s1 + $0x18] sm:$0xff]
    %25 = vset.pattern.permute.xlu0 0
    %26 = vperm.xlu0 %25, %v20
    %v27 = vpop.permute.xlu0 %26
    %30 = vset.pattern.permute.xlu0 0
    %31 = vperm.xlu0 %30, %v21
    %v32 = vpop.permute.xlu0 %31
    %35 = vset.pattern.permute.xlu0 0
    %36 = vperm.xlu0 %35, %v22
    %v37 = vpop.permute.xlu0 %36
    %40 = vset.pattern.permute.xlu0 0
    %41 = vperm.xlu0 %40, %v23
    %v42 = vpop.permute.xlu0 %41
    %v44 = vmul.f32 %v16, %v27
    %v45 = vmul.f32 %v17, %v32
    %v46 = vmul.f32 %v18, %v37
    %v47 = vmul.f32 %v19, %v42
    %v48 = vadd.f32 %v44, %v45
    %v49 = vadd.f32 %v48, %v46
    %v50 = vadd.f32 %v49, %v47
    %v51 = vrot.slane %v50, 4
    %v52 = vadd.f32 %v50, %v51
    %v53 = vrot.slane %v52, 2
    %v54 = vadd.f32 %v52, %v53
    %v55 = vrot.slane %v54, 1
    %v56 = vadd.f32 %v54, %v55
    %s57 = sld [smem:[#allocation2]]
    %v58 = vstv %s57
    %v59 = vadd.f32 %v56, %v58
    %60 = vst [vmem:[#allocation3] sm:$0x1] %v59
    // Predicated region
    $region14: #{tpu_custom_call.1} parent=1 // pred_check
      _
    $region15: #{tpu_custom_call.1} parent=1 // pred_check_branch
      %62 = sbr.rel (0) target = $region17
    $region16: #{tpu_custom_call.1} parent=1 // pred_region
      %s64 = ssub.s32 16, 16
      %65 = vsyncadd [#allocation4], %s64
      %s67 = sshll.u32 [#allocation3], 4
      %s68 = int_to_ptr.vmem [resolvable:$true] %s67
      %70 = dma.vmem_to_hbm [thread:$0]  %s68, 16, %s3, [#allocation4]
    $region17: #{tpu_custom_call.1} parent=1 // pred_fallthru
      _
    // Predicated region
    $region18: #{tpu_custom_call.1} parent=1 // pred_check
      _
    $region19: #{tpu_custom_call.1} parent=1 // pred_check_branch
      %72 = sbr.rel (0) target = $region21
    $region20: #{tpu_custom_call.1} parent=1 // pred_region
      %73 = dma.done [#allocation4], 16
    $region21: #{tpu_custom_call.1} parent=1 // pred_fallthru
      _
    %74 = vsyncpa [#allocation4], 1

</llo_original>
